<compile_context>
chip_gen: v5e
topology: v5e:2x2
jax: 0.10.0
libtpu: 0.0.40
codegen_flags: <defaults>
</compile_context>

<pallas_src>
import functools
import math

import jax
import jax.numpy as jnp
from jax.experimental import pallas as pl
from jax.experimental.pallas import tpu as pltpu


_DEFAULT_PIPELINE_BUDGET = 40 * 1024 * 1024   # total pipeline footprint target


# ----------------------------------------------------------------------------
# Pallas epilogue kernels
# ----------------------------------------------------------------------------
def _epilogue_kernel(x_ref, noise_ref, par_ref, o_ref, *, hw, eps):
    """Single-pass epilogue: full HW on lanes, rows on sublanes.

    x_ref:     (R, HW)  feature-map rows (one row = one (batch, channel) map)
    noise_ref: (1, HW)  noise buffer (resident across grid steps), io dtype
    par_ref:   (R, 4)   f32 per-row params: [noise_w, bias, style_scale+1, shift]
    """
    x = x_ref[...].astype(jnp.float32)
    noise = noise_ref[...].astype(jnp.float32)
    nw = par_ref[:, 0:1]
    b = par_ref[:, 1:2]
    sc = par_ref[:, 2:3]
    sh = par_ref[:, 3:4]

    # NoiseApplyingLayer + bias + LeakyReLU(0.2)
    y = x + noise * nw + b
    y = jnp.maximum(y, 0.2 * y)

    # InstanceNorm over spatial (lane) axis — single pass, f32 accumulators.
    inv_hw = 1.0 / float(hw)
    s = jnp.sum(y, axis=-1, keepdims=True)
    ss = jnp.sum(y * y, axis=-1, keepdims=True)
    mean = s * inv_hw
    var = jnp.maximum(ss * inv_hw - mean * mean, 0.0)   # clamp cancellation

    # Fused normalize + style modulation: o = y * alpha + beta
    alpha = jax.lax.rsqrt(var + eps) * sc               # sc already has the +1
    beta = sh - mean * alpha
    o_ref[...] = (y * alpha + beta).astype(o_ref.dtype)


def _epilogue_kernel_hw_tiled(x_ref, noise_ref, par_ref, o_ref,
                              sum_ref, ssq_ref, *, hw, eps):
    """Two-pass epilogue for large HW. grid = (row_tiles, phase=2, hw_tiles).

    phase 0: accumulate per-row sum / sum-of-squares of lrelu(x+noise*nw+b)
             into VMEM scratch (output block pinned to (r, 0), never written).
    phase 1: recompute the activation and emit normalized + styled output.
    """
    p = pl.program_id(1)
    h = pl.program_id(2)

    nw = par_ref[:, 0:1]
    b = par_ref[:, 1:2]

    x = x_ref[...].astype(jnp.float32)
    noise = noise_ref[...].astype(jnp.float32)
    y = x + noise * nw + b
    y = jnp.maximum(y, 0.2 * y)

    @pl.when(jnp.logical_and(p == 0, h == 0))
    def _():
        sum_ref[...] = jnp.zeros_like(sum_ref)
        ssq_ref[...] = jnp.zeros_like(ssq_ref)

    @pl.when(p == 0)
    def _():
        sum_ref[...] += jnp.sum(y, axis=-1, keepdims=True)
        ssq_ref[...] += jnp.sum(y * y, axis=-1, keepdims=True)

    @pl.when(p == 1)
    def _():
        inv_hw = 1.0 / float(hw)
        mean = sum_ref[...] * inv_hw
        var = jnp.maximum(ssq_ref[...] * inv_hw - mean * mean, 0.0)
        sc = par_ref[:, 2:3]
        sh = par_ref[:, 3:4]
        alpha = jax.lax.rsqrt(var + eps) * sc
        beta = sh - mean * alpha
        o_ref[...] = (y * alpha + beta).astype(o_ref.dtype)


# ----------------------------------------------------------------------------
# Tile planning (budgets the whole pipeline, not just one x-block)
# ----------------------------------------------------------------------------
def _plan_tiles(rows, hw, itemsize, budget):
    """Returns (row_tile, hw_tile). hw_tile == hw means the single-pass path."""
    # Per (row, lane) element across the pipeline:
    #   2x input block + 2x output block (io dtype) + ~3x f32 working copies.
    per_elem = 4 * itemsize + 3 * 4
    max_elems = max(budget // per_elem, 8 * 128)

    def _cap_two_steps(rt):
        # Guarantee >= 2 grid steps so the parallel row axis shards across
        # v7x's two TensorCores.
        if rows >= 16:
            half = -(-rows // 2)
            half = -(-half // 8) * 8
            rt = min(rt, half)
        return rt

    if hw <= 128 or 8 * hw <= max_elems:
        # Full-HW blocks; largest sublane-aligned row tile that fits the budget.
        if rows <= 8:
            return rows, hw
        rt = min(rows, max(8, (max_elems // hw) // 8 * 8))
        return _cap_two_steps(rt), hw

    # HW (lane) tiling needed: min row tile, largest 128-multiple divisor of hw.
    rt = rows if rows < 8 else 8
    hw_budget = max(128, (max_elems // max(rt, 8)) // 128 * 128)
    hw_t = None
    m = 128
    lim = min(hw, hw_budget)
    while m <= lim:
        if hw % m == 0:
            hw_t = m
        m += 128
    if hw_t is None:
        # TODO(synk): HW has no multiple-of-128 divisor; fall back to full-HW
        # blocks (correct, just a bigger pipeline footprint).
        if rows <= 8:
            return rows, hw
        return _cap_two_steps(8), hw
    return rt, hw_t


def _footprint_bytes(rt, hw_t, itemsize):
    io_blocks = 4 * rt * hw_t * itemsize      # 2x in + 2x out double buffers
    f32_work = 3 * rt * hw_t * 4              # Mosaic-materialized f32 temps
    noise = 2 * 8 * hw_t * itemsize           # (1, hw_t) pads to 8 sublanes
    small = 4 * max(rt, 8) * 128 * 4          # params + stats scratch (padded)
    return io_blocks + f32_work + noise + small


# ----------------------------------------------------------------------------
# Epilogue wrapper
# ----------------------------------------------------------------------------
def epilogue_pallas(x_nchw, w, noise, noise_weight, bias, dense_weight,
                    dense_bias, *, eps=1e-8,
                    max_pipeline_bytes=_DEFAULT_PIPELINE_BUDGET):
    """EpilogueBlock forward. x_nchw: (B, C, H, W); w: (B, w_space_dim).

    Output dtype == x_nchw.dtype (pass bf16 feature maps for halved HBM traffic;
    all reduction/normalization math is f32 inside the kernel).
    """
    B, C, H, W = x_nchw.shape
    Wd = w.shape[1]
    HW = H * W
    rows = B * C
    dtype = x_nchw.dtype
    itemsize = jnp.dtype(dtype).itemsize

    # --- Style matmul hoisted out of the kernel (tiny, MXU-wasteful inside) --
    # DenseBlock wscale: gain=1.0, kernel_size=1, lr_multiplier=1.0.
    wscale = 1.0 / math.sqrt(Wd)
    style = jnp.dot(w.astype(jnp.float32),
                    dense_weight.astype(jnp.float32).T) * wscale
    style = style + dense_bias.astype(jnp.float32).reshape(1, -1)    # (B, 2C)
    scale_rows = (style[:, :C] + 1.0).reshape(rows, 1)               # fold +1
    shift_rows = style[:, C:].reshape(rows, 1)
    nw_rows = jnp.broadcast_to(
        noise_weight.astype(jnp.float32).reshape(1, C), (B, C)).reshape(rows, 1)
    bias_rows = jnp.broadcast_to(
        bias.astype(jnp.float32).reshape(1, C), (B, C)).reshape(rows, 1)
    # One (rows, 4) operand -> one DMA / double-buffer pair per grid step.
    params = jnp.concatenate([nw_rows, bias_rows, scale_rows, shift_rows],
                             axis=1)                                  # (rows,4) f32

    # --- Flatten feature map; keep I/O in the feature-map dtype --------------
    x2d = x_nchw.reshape(rows, HW)
    noise2d = noise.reshape(1, HW).astype(dtype)      # cast to f32 in-kernel

    rt, hw_t = _plan_tiles(rows, HW, itemsize, max_pipeline_bytes)
    footprint = _footprint_bytes(rt, hw_t, itemsize)
    vmem_limit = int(min(48 << 20, max(32 << 20, footprint + (8 << 20))))

    if hw_t == HW:
        # Single-pass kernel: rows tiled, full spatial extent on lanes.
        out2d = pl.pallas_call(
            functools.partial(_epilogue_kernel, hw=HW, eps=eps),
            out_shape=jax.ShapeDtypeStruct((rows, HW), dtype),
            grid=(pl.cdiv(rows, rt),),
            in_specs=[
                pl.BlockSpec((rt, HW), lambda i: (i, 0)),   # x rows (pipelined)
                pl.BlockSpec((1, HW), lambda i: (0, 0)),    # noise (resident)
                pl.BlockSpec((rt, 4), lambda i: (i, 0)),    # per-row params
            ],
            out_specs=pl.BlockSpec((rt, HW), lambda i: (i, 0)),
            compiler_params=pltpu.CompilerParams(
                dimension_semantics=("parallel",),
                vmem_limit_bytes=vmem_limit),
        )(x2d, noise2d, params)
    else:
        # Two-pass kernel: stats sweep (phase 0) then normalize sweep (phase 1)
        # over HW tiles. Output block index is pinned to (r, 0) during phase 0
        # (never written), so the only HBM output traffic is the phase-1 writes.
        grid = (pl.cdiv(rows, rt), 2, HW // hw_t)
        out2d = pl.pallas_call(
            functools.partial(_epilogue_kernel_hw_tiled, hw=HW, eps=eps),
            out_shape=jax.ShapeDtypeStruct((rows, HW), dtype),
            grid=grid,
            in_specs=[
                pl.BlockSpec((rt, hw_t), lambda r, p, h: (r, h)),
                pl.BlockSpec((1, hw_t), lambda r, p, h: (0, h)),
                pl.BlockSpec((rt, 4), lambda r, p, h: (r, 0)),
            ],
            out_specs=pl.BlockSpec((rt, hw_t), lambda r, p, h: (r, h * p)),
            scratch_shapes=[pltpu.VMEM((rt, 1), jnp.float32),
                            pltpu.VMEM((rt, 1), jnp.float32)],
            compiler_params=pltpu.CompilerParams(
                dimension_semantics=("parallel", "arbitrary", "arbitrary"),
                vmem_limit_bytes=vmem_limit),
        )(x2d, noise2d, params)

    return out2d.reshape(B, C, H, W)


# ----------------------------------------------------------------------------
# UpConvBlock wrapper (upsample + conv + blur on XLA, epilogue in Pallas)
# ----------------------------------------------------------------------------
def _blur_kernel(channels, dtype):
    k1 = jnp.array([1.0, 2.0, 1.0], dtype=dtype)
    k = jnp.outer(k1, k1)
    k = k / jnp.sum(k)
    return jnp.tile(k[None, None, :, :], (channels, 1, 1, 1))   # (C,1,3,3) OIHW


def _upsample_conv_blur(x, conv_weight, *, gain=math.sqrt(2.0), lr_mult=1.0):
    # TODO(synk): fold into a stride-2 conv_transpose (blur merged, upfirdn
    # style) to avoid materializing the 4x upsampled intermediate in HBM.
    B, Cin, H, W = x.shape
    Cout = conv_weight.shape[0]
    scale = gain / math.sqrt(Cin * 3 * 3) * lr_mult   # UpConvBlock wscale
    xu = jnp.repeat(jnp.repeat(x, 2, axis=2), 2, axis=3)          # nearest x2
    y = jax.lax.conv_general_dilated(
        xu, conv_weight, window_strides=(1, 1), padding=((1, 1), (1, 1)),
        dimension_numbers=("NCHW", "OIHW", "NCHW")) * scale
    y = jax.lax.conv_general_dilated(
        y, _blur_kernel(Cout, y.dtype), window_strides=(1, 1),
        padding=((1, 1), (1, 1)),
        dimension_numbers=("NCHW", "OIHW", "NCHW"),
        feature_group_count=Cout)
    return y


def up_conv_block(x, w, conv_weight, noise, noise_weight, bias, dense_weight,
                  dense_bias, *, eps=1e-8, epilogue_io_dtype=jnp.bfloat16):
    """UpConvBlock forward: x (B, Cin, H, W) at half resolution; w (B, Wd).

    Production path runs the HBM-bound epilogue with bf16 I/O (output is bf16);
    pass epilogue_io_dtype=None to keep the conv dtype end-to-end.
    """
    y = _upsample_conv_blur(x, conv_weight)
    if epilogue_io_dtype is not None and y.dtype != epilogue_io_dtype:
        y = y.astype(epilogue_io_dtype)
    return epilogue_pallas(y, w, noise, noise_weight, bias, dense_weight,
                           dense_bias, eps=eps)


# ----------------------------------------------------------------------------
# Pure-JAX reference mirroring the PyTorch forward
# ----------------------------------------------------------------------------
def up_conv_block_ref(x, w, conv_weight, noise, noise_weight, bias,
                      dense_weight, dense_bias, *, eps=1e-8):
    B = x.shape[0]
    Cout = conv_weight.shape[0]
    Wd = w.shape[1]
    y = _upsample_conv_blur(x, conv_weight)
    # EpilogueBlock
    y = y + noise * noise_weight.reshape(1, Cout, 1, 1)
    y = y + bias.reshape(1, Cout, 1, 1)
    y = jnp.where(y >= 0, y, 0.2 * y)
    y = y - jnp.mean(y, axis=(2, 3), keepdims=True)
    y = y / jnp.sqrt(jnp.mean(y * y, axis=(2, 3), keepdims=True) + eps)
    style = (w @ dense_weight.T) * (1.0 / math.sqrt(Wd)) + dense_bias.reshape(1, -1)
    style = style.reshape(B, 2, Cout, 1, 1)
    return y * (style[:, 0] + 1.0) + style[:, 1]


if __name__ == "__main__":
    key = jax.random.PRNGKey(0)
    B, CIN, COUT, RES, WDIM = 2, 4, 4, 16, 32   # RES = output resolution

    k = jax.random.split(key, 8)
    x = jax.random.normal(k[0], (B, CIN, RES // 2, RES // 2), jnp.float32)
    w = jax.random.normal(k[1], (B, WDIM), jnp.float32)

    conv_weight = 0.1 * jax.random.normal(k[2], (COUT, CIN, 3, 3), jnp.float32)
    noise = jax.random.normal(k[3], (1, 1, RES, RES), jnp.float32)       # buffer
    noise_weight = 0.1 * jax.random.normal(k[4], (COUT,), jnp.float32)
    bias = 0.1 * jax.random.normal(k[5], (COUT,), jnp.float32)
    dense_weight = 0.05 * jax.random.normal(k[6], (2 * COUT, WDIM), jnp.float32)
    dense_bias = 0.1 * jax.random.normal(k[7], (2 * COUT,), jnp.float32)

    ref = up_conv_block_ref(x, w, conv_weight, noise, noise_weight, bias,
                            dense_weight, dense_bias)

    # 1) Strict f32-I/O epilogue path (exact semantics check).
    out_f32 = up_conv_block(x, w, conv_weight, noise, noise_weight, bias,
                            dense_weight, dense_bias, epilogue_io_dtype=None)
    out_f32 = jax.block_until_ready(out_f32)
    assert out_f32.shape == (B, COUT, RES, RES)
    assert jnp.allclose(out_f32, ref, atol=1e-4, rtol=1e-4)

    # 2) Production bf16-I/O path (default): halves epilogue HBM traffic.
    out_bf16 = up_conv_block(x, w, conv_weight, noise, noise_weight, bias,
                             dense_weight, dense_bias)
    out_bf16 = jax.block_until_ready(out_bf16)
    assert out_bf16.dtype == jnp.bfloat16
    assert jnp.allclose(out_bf16.astype(jnp.float32), ref, atol=0.15, rtol=0.1)

    # 3) HW-tiled two-pass path (used automatically at large resolutions);
    #    force it here with a tiny pipeline budget to exercise the code path.
    y_f32 = _upsample_conv_blur(x, conv_weight)
    out_tiled = epilogue_pallas(y_f32, w, noise, noise_weight, bias,
                                dense_weight, dense_bias,
                                max_pipeline_bytes=32 * 1024)
    out_tiled = jax.block_until_ready(out_tiled)
    assert jnp.allclose(out_tiled, ref, atol=1e-4, rtol=1e-4)

    print("KERNEL_OK")
</pallas_src>

<mosaic_0001>
module attributes {stable_mosaic.version = 11 : i64} {
  func.func @_epilogue_kernel(%arg0: i32, %arg1: memref<8x256xf32, #tpu.memory_space<vmem>>, %arg2: memref<1x256xf32, #tpu.memory_space<vmem>>, %arg3: memref<8x4xf32, #tpu.memory_space<vmem>>, %arg4: memref<8x256xf32, #tpu.memory_space<vmem>>) attributes {dimension_semantics = [#tpu.dimension_semantics<parallel>], iteration_bounds = array<i64: 1>, scalar_prefetch = 0 : i64, scratch_operands = 0 : i64, tpu.core_type = #tpu.core_type<tc>, window_params = [{transform_indices = @transform_0, window_bounds = array<i64: 8, 256>}, {pipeline_mode = #tpu.pipeline_mode<synchronous>, transform_indices = @transform_1, window_bounds = array<i64: 1, 256>}, {transform_indices = @transform_2, window_bounds = array<i64: 8, 4>}, {transform_indices = @transform_3, window_bounds = array<i64: 8, 256>}]} {
    %c0 = arith.constant 0 : index
    %c0_0 = arith.constant 0 : index
    %0 = vector.load %arg1[%c0, %c0_0] : memref<8x256xf32, #tpu.memory_space<vmem>>, vector<8x256xf32>
    %c0_1 = arith.constant 0 : index
    %c0_2 = arith.constant 0 : index
    %1 = vector.load %arg2[%c0_1, %c0_2] : memref<1x256xf32, #tpu.memory_space<vmem>>, vector<1x256xf32>
    %c0_3 = arith.constant 0 : index
    %c0_4 = arith.constant 0 : index
    %2 = vector.load %arg3[%c0_3, %c0_4] : memref<8x4xf32, #tpu.memory_space<vmem>>, vector<8x1xf32>
    %c0_5 = arith.constant 0 : index
    %c1 = arith.constant 1 : index
    %3 = vector.load %arg3[%c0_5, %c1] : memref<8x4xf32, #tpu.memory_space<vmem>>, vector<8x1xf32>
    %c0_6 = arith.constant 0 : index
    %c2 = arith.constant 2 : index
    %4 = vector.load %arg3[%c0_6, %c2] : memref<8x4xf32, #tpu.memory_space<vmem>>, vector<8x1xf32>
    %c0_7 = arith.constant 0 : index
    %c3 = arith.constant 3 : index
    %5 = vector.load %arg3[%c0_7, %c3] : memref<8x4xf32, #tpu.memory_space<vmem>>, vector<8x1xf32>
    %6 = vector.broadcast %1 : vector<1x256xf32> to vector<8x256xf32>
    %7 = vector.broadcast %2 : vector<8x1xf32> to vector<8x256xf32>
    %8 = arith.mulf %6, %7 : vector<8x256xf32>
    %9 = arith.addf %0, %8 : vector<8x256xf32>
    %10 = vector.broadcast %3 : vector<8x1xf32> to vector<8x256xf32>
    %11 = arith.addf %9, %10 : vector<8x256xf32>
    %cst = arith.constant 2.000000e-01 : f32
    %12 = vector.broadcast %cst : f32 to vector<8x256xf32>
    %13 = arith.mulf %12, %11 : vector<8x256xf32>
    %14 = arith.maximumf %11, %13 : vector<8x256xf32>
    %cst_8 = arith.constant dense<0.000000e+00> : vector<8xf32>
    %15 = vector.multi_reduction <add>, %14, %cst_8 [1] : vector<8x256xf32> to vector<8xf32>
    %16 = vector.shape_cast %15 : vector<8xf32> to vector<8x1xf32>
    %17 = arith.mulf %14, %14 : vector<8x256xf32>
    %cst_9 = arith.constant dense<0.000000e+00> : vector<8xf32>
    %18 = vector.multi_reduction <add>, %17, %cst_9 [1] : vector<8x256xf32> to vector<8xf32>
    %19 = vector.shape_cast %18 : vector<8xf32> to vector<8x1xf32>
    %cst_10 = arith.constant 3.906250e-03 : f32
    %20 = vector.broadcast %cst_10 : f32 to vector<8x1xf32>
    %21 = arith.mulf %16, %20 : vector<8x1xf32>
    %cst_11 = arith.constant 3.906250e-03 : f32
    %22 = vector.broadcast %cst_11 : f32 to vector<8x1xf32>
    %23 = arith.mulf %19, %22 : vector<8x1xf32>
    %24 = arith.mulf %21, %21 : vector<8x1xf32>
    %25 = arith.subf %23, %24 : vector<8x1xf32>
    %cst_12 = arith.constant 0.000000e+00 : f32
    %26 = vector.broadcast %cst_12 : f32 to vector<8x1xf32>
    %27 = arith.maximumf %25, %26 : vector<8x1xf32>
    %cst_13 = arith.constant 9.99999993E-9 : f32
    %28 = vector.broadcast %cst_13 : f32 to vector<8x1xf32>
    %29 = arith.addf %27, %28 : vector<8x1xf32>
    %30 = math.rsqrt %29 : vector<8x1xf32>
    %31 = arith.mulf %30, %4 : vector<8x1xf32>
    %32 = arith.mulf %21, %31 : vector<8x1xf32>
    %33 = arith.subf %5, %32 : vector<8x1xf32>
    %34 = vector.broadcast %31 : vector<8x1xf32> to vector<8x256xf32>
    %35 = arith.mulf %14, %34 : vector<8x256xf32>
    %36 = vector.broadcast %33 : vector<8x1xf32> to vector<8x256xf32>
    %37 = arith.addf %35, %36 : vector<8x256xf32>
    %c0_14 = arith.constant 0 : index
    %c0_15 = arith.constant 0 : index
    %38 = vector.load %arg4[%c0_14, %c0_15] : memref<8x256xf32, #tpu.memory_space<vmem>>, vector<8x256xf32>
    tpu.vector_store %arg4[%c0_14, %c0_15], %37 {strides = array<i32>} : memref<8x256xf32, #tpu.memory_space<vmem>>, vector<8x256xf32>,
    return
  }
  func.func @transform_0(%arg0: i32) -> (i32, i32) {
    %c0_i32 = arith.constant 0 : i32
    %c0_i32_0 = arith.constant 0 : i32
    return %arg0, %c0_i32 : i32, i32
  }
  func.func @transform_1(%arg0: i32) -> (i32, i32) {
    %c0_i32 = arith.constant 0 : i32
    %c0_i32_0 = arith.constant 0 : i32
    %c0_i32_1 = arith.constant 0 : i32
    return %c0_i32, %c0_i32_0 : i32, i32
  }
  func.func @transform_2(%arg0: i32) -> (i32, i32) {
    %c0_i32 = arith.constant 0 : i32
    %c0_i32_0 = arith.constant 0 : i32
    return %arg0, %c0_i32 : i32, i32
  }
  func.func @transform_3(%arg0: i32) -> (i32, i32) {
    %c0_i32 = arith.constant 0 : i32
    %c0_i32_0 = arith.constant 0 : i32
    return %arg0, %c0_i32 : i32, i32
  }
}

</mosaic_0001>

<llo_original>
// kernel: tpu_custom_call.1
$region0: #{tpu_custom_call.1}
  #allocation0 [shape = 'u32[]', space=smem, size = 0x4, offset = 0x4, fixed_abs, tag = 'smem constant byte address 0x4 - core index']
  #allocation1 [shape = 'u32[72,128]{1,0:T(1,128)}', space=vmem, size = 0x9000, scoped, tag = 'internal scratch']
  %s0 = inlined_call_operand.hbm [shape: f32[8,256], index: 0, kind: input, shape index: {}]
  %s1 = inlined_call_operand.vmem [shape: f32[1,256], index: 1, kind: input, shape index: {}]
  %s2 = inlined_call_operand.vmem [shape: f32[8,4], index: 2, kind: input, shape index: {}]
  %s3 = inlined_call_operand.hbm [shape: f32[8,256], index: 3, kind: output, shape index: {}]
  %s4 = sld [smem:[#allocation0]]
  $region26: #{tpu_custom_call.1} parent=0
    _
  %s6 = ssub.s32 1, %s4
  %s7 = scalar_select 0, %s6, %s4
  $region1: #{tpu_custom_call.1} parent=0
    #allocation2 [shape = 'u8[8192]{0}', space=vmem, size = 0x2000, scoped, tag = 'input window, operand 0, single buffered']
    #allocation3 [shape = 's32[1]{0}', space=sflag, size = 0x4, scoped, tag = 'scoped memory for tpu_custom_call.1']
    #allocation4 [shape = 's32[1]{0}', space=sflag, size = 0x4, scoped, tag = 'scoped memory for tpu_custom_call.1']
    #allocation5 [shape = 'u8[8192]{0}', space=vmem, size = 0x2000, scoped, tag = 'output window, operand 0, single buffered']
    %8 = vsyncpa [#allocation3], 0
    %9 = vsyncpa [#allocation4], 0
    // Predicated region
    $region2: #{tpu_custom_call.1} parent=1 // pred_check
      _
    $region3: #{tpu_custom_call.1} parent=1 // pred_check_branch
      %11 = sbr.rel (0) target = $region5
    $region4: #{tpu_custom_call.1} parent=1 // pred_region
      %13 = vsyncadd [#allocation3], 0
      %s15 = sshll.u32 %s0, 4
      %s16 = int_to_ptr.hbm [resolvable:$true] %s15
      %s17 = sshll.u32 [#allocation2], 4
      %s18 = int_to_ptr.vmem [resolvable:$true] %s17
      %20 = dma.hbm_to_vmem [thread:$0]  %s16, 256, %s18, [#allocation3]
    $region5: #{tpu_custom_call.1} parent=1 // pred_fallthru
      _
    // Predicated region
    $region6: #{tpu_custom_call.1} parent=1 // pred_check
      _
    $region7: #{tpu_custom_call.1} parent=1 // pred_check_branch
      %22 = sbr.rel (0) target = $region9
    $region8: #{tpu_custom_call.1} parent=1 // pred_region
      _
    $region9: #{tpu_custom_call.1} parent=1 // pred_fallthru
      _
    // Predicated region
    $region10: #{tpu_custom_call.1} parent=1 // pred_check
      _
    $region11: #{tpu_custom_call.1} parent=1 // pred_check_branch
      %24 = sbr.rel (0) target = $region13
    $region12: #{tpu_custom_call.1} parent=1 // pred_region
      _
    $region13: #{tpu_custom_call.1} parent=1 // pred_fallthru
      _
    // Predicated region
    $region14: #{tpu_custom_call.1} parent=1 // pred_check
      _
    $region15: #{tpu_custom_call.1} parent=1 // pred_check_branch
      %26 = sbr.rel (0) target = $region17
    $region16: #{tpu_custom_call.1} parent=1 // pred_region
      %28 = dma.done [#allocation3], 256
    $region17: #{tpu_custom_call.1} parent=1 // pred_fallthru
      _
    %v29 = vld [vmem:[#allocation2] sm:$0xff]
    %v30 = vld [vmem:[#allocation2 + $0x8] sm:$0xff]
    %v31 = vld [vmem:[%s1] sm:$0x3]
    %v32 = vld [vmem:[%s2] sm:$0xff]
    %v34 = vperm.slane %v31, 0
    %v35 = vperm.slane %v31, 1
    %39 = vset.pattern.permute.xlu0 0
    %40 = vperm.xlu0 %39, %v32
    %v41 = vpop.permute.xlu0 %40
    %v43 = vmul.f32 %v34, %v41
    %v44 = vmul.f32 %v35, %v41
    %v45 = vadd.f32 %v29, %v43
    %v46 = vadd.f32 %v30, %v44
    %47 = vset.pattern.permute.xlu0 1
    %48 = vperm.xlu0 %47, %v32
    %v49 = vpop.permute.xlu0 %48
    %v51 = vadd.f32 %v45, %v49
    %v52 = vadd.f32 %v46, %v49
    %v53 = vmul.f32 %v51, 0.2
    %v54 = vmul.f32 %v52, 0.2
    %v55 = vmax.f32 %v51, %v53
    %v56 = vmax.f32 %v52, %v54
    %v57 = vadd.f32 %v55, %v56
    %58 = vadd.xlane.f32.xlu0 %v57
    %v59 = vpop.xlane.xlu0 %58
    %v60 = vmul.f32 %v55, %v55
    %v61 = vmul.f32 %v56, %v56
    %v62 = vadd.f32 %v60, %v61
    %63 = vadd.xlane.f32.xlu0 %v62
    %v64 = vpop.xlane.xlu0 %63
    %v65 = vmul.f32 %v59, 0.00390625
    %v66 = vmul.f32 %v64, 0.00390625
    %v67 = vmul.f32 %v65, %v65
    %v68 = vsub.f32 %v66, %v67
    %v69 = vmax.f32 %v68, 0.0
    %v70 = vadd.f32 %v69, 1e-08
    %v71 = vrsqrt.pop %v70
    %v72 = vmul.f32 %v71, %v70
    %v73 = vmul.f32 %v72, %v71
    %v74 = vmul.f32 0.5, %v73
    %v75 = vsub.f32 1.5, %v74
    %v76 = vmul.f32 %v71, %v75
    %vm77 = vweird.f32 %v70
    %vm78 = vweird.f32 %v71
    %vm79 = vmor %vm77, %vm78
    %v80 = vsel %vm79, %v71, %v76
    %v81 = vmul.f32 %v80, %v32
    %v82 = vmul.f32 %v65, %v81
    %84 = vrot.lane.b32.xlu0 %v82, 1
    %v85 = vpop.permute.xlu0 %84
    %v87 = vsub.f32 %v32, %v85
    %89 = vset.pattern.permute.xlu0 2
    %90 = vperm.xlu0 %89, %v81
    %v91 = vpop.permute.xlu0 %90
    %v93 = vmul.f32 %v55, %v91
    %v94 = vmul.f32 %v56, %v91
    %96 = vset.pattern.permute.xlu0 3
    %97 = vperm.xlu0 %96, %v87
    %v98 = vpop.permute.xlu0 %97
    %v100 = vadd.f32 %v93, %v98
    %v101 = vadd.f32 %v94, %v98
    %102 = vst [vmem:[#allocation5] sm:$0xff] %v100
    %103 = vst [vmem:[#allocation5 + $0x8] sm:$0xff] %v101
    // Predicated region
    $region18: #{tpu_custom_call.1} parent=1 // pred_check
      _
    $region19: #{tpu_custom_call.1} parent=1 // pred_check_branch
      %105 = sbr.rel (0) target = $region21
    $region20: #{tpu_custom_call.1} parent=1 // pred_region
      %107 = vsyncadd [#allocation4], 0
      %s109 = sshll.u32 [#allocation5], 4
      %s110 = int_to_ptr.vmem [resolvable:$true] %s109
      %s111 = sshll.u32 %s3, 4
      %s112 = int_to_ptr.hbm [resolvable:$true] %s111
      %114 = dma.vmem_to_hbm [thread:$0]  %s110, 256, %s112, [#allocation4]
    $region21: #{tpu_custom_call.1} parent=1 // pred_fallthru
      _
    // Predicated region
    $region22: #{tpu_custom_call.1} parent=1 // pred_check
      _
    $region23: #{tpu_custom_call.1} parent=1 // pred_check_branch
      %116 = sbr.rel (0) target = $region25
    $region24: #{tpu_custom_call.1} parent=1 // pred_region
      %118 = dma.done [#allocation4], 256
    $region25: #{tpu_custom_call.1} parent=1 // pred_fallthru
      _
    %119 = vsyncpa [#allocation3], 1
    %120 = vsyncpa [#allocation4], 1

</llo_original>
